<compile_context>
chip_gen: v6e
topology: v6e:2x2x1
jax: 0.10.0
libtpu: 0.0.40
codegen_flags: <defaults>
</compile_context>

<pallas_src>
import jax
import jax.numpy as jnp
from jax import lax
from jax.experimental import pallas as pl
from jax.experimental.pallas import tpu as pltpu


_INV_SQRT2 = 0.7071067811865476


def _round_up(x, m):
    return (x + m - 1) // m * m


def _gelu_exact(x, *, approx_recip):
    """torch.nn.GELU() default (erf form), VALU-lean evaluation.

    erf via Abramowitz & Stegun 7.1.26 (|err| <= 1.5e-7), with the
    0.5*x*(1+erf) and sign handling folded in algebraically:
        z = |x|/sqrt(2),  t = 1/(1 + p*z)
        g = 0.5*x * poly(t) * exp(-z^2)
        gelu(x) = x - g   (x >= 0)
        gelu(x) = g       (x <  0)
    reciprocal and exp run on the EUP slot; the VALU only sees muls/adds/select.
    """
    p = 0.3275911
    a1, a2, a3, a4, a5 = (0.254829592, -0.284496736, 1.421413741,
                          -1.453152027, 1.061405429)
    z = jnp.abs(x) * _INV_SQRT2
    t = pl.reciprocal(1.0 + p * z, approx=approx_recip)          # EUP
    poly = ((((a5 * t + a4) * t + a3) * t + a2) * t + a1) * t
    g = (0.5 * x) * poly * jnp.exp(-(z * z))                     # exp on EUP
    return jnp.where(x >= 0.0, x - g, g)


def _make_kernel(n_chunks, fc, compute_dtype, approx_recip):
    def kernel(x_ref, w1_ref, b1_ref, w2_ref, b2_ref, o_ref, acc_ref):
        # x_ref:  (TM, Hp) row tile in compute dtype -- also the residual
        # w1_ref: (Hp, Fp)   w2_ref: (Fp, Hp)   compute dtype, resident in VMEM
        # b1_ref: (1, Fp)    b2_ref: (1, Hp)    float32
        # acc_ref: (TM, Hp)  float32 scratch accumulator
        x = x_ref[...]

        # Initialize the accumulator with residual + output bias, so no extra
        # add pass is needed at the end:  acc = x + b2 + sum_chunks(...)
        acc_ref[...] = x.astype(jnp.float32) + b2_ref[...]

        if n_chunks == 1:
            h = jnp.dot(x, w1_ref[...],
                        preferred_element_type=jnp.float32) + b1_ref[...]
            h = _gelu_exact(h, approx_recip=approx_recip)
            acc_ref[...] += jnp.dot(h.astype(compute_dtype), w2_ref[...],
                                    preferred_element_type=jnp.float32)
        else:
            def chunk(c, carry):
                idx = c * fc
                start = idx if isinstance(idx, int) else pl.multiple_of(idx, 128)
                h = jnp.dot(x, w1_ref[:, pl.ds(start, fc)],
                            preferred_element_type=jnp.float32)
                h = _gelu_exact(h + b1_ref[:, pl.ds(start, fc)],
                                approx_recip=approx_recip)
                acc_ref[...] += jnp.dot(h.astype(compute_dtype),
                                        w2_ref[pl.ds(start, fc), :],
                                        preferred_element_type=jnp.float32)
                return carry

            lax.fori_loop(0, n_chunks, chunk, 0, unroll=n_chunks <= 4)

        o_ref[...] = acc_ref[...].astype(o_ref.dtype)

    return kernel


def _tpu_generation_info():
    """(per-core VMEM capacity bytes, #TensorCores per chip), with fallbacks."""
    cap = 64 << 20                      # conservative default (v7x per-TC VMEM)
    try:
        cap = int(pltpu.get_tpu_info().vmem_capacity_bytes)
    except Exception:
        pass
    num_tc = 1
    try:
        kind = jax.devices()[0].device_kind.lower()
        if "7" in kind:                 # v7x: 2 TensorCores, 64 MiB VMEM each
            num_tc = 2
            cap = min(cap, 64 << 20)
    except Exception:
        pass
    return cap, num_tc


def residual_add_mlp(x, w1, b1, w2, b2, *, compute_dtype=jnp.bfloat16,
                     tile_m=512, ff_chunk=1024):
    """out = GELU_exact(x @ w1 + b1) @ w2 + b2 + x, fused in one Pallas kernel.

    x: (B, S, H)  w1: (H, F)  b1: (F,)  w2: (F, H)  b2: (H,)
    compute_dtype: MXU operand dtype (default bf16, f32 accumulation).  Pass
    x.dtype (e.g. jnp.float32) for full-precision matmuls.
    """
    B, S, H = x.shape
    Hw, F = w1.shape
    assert Hw == H and w2.shape == (F, H) and b1.shape == (F,) and b2.shape == (H,)
    rows = B * S
    out_dtype = x.dtype
    if compute_dtype is None:
        compute_dtype = x.dtype
    compute_dtype = jnp.dtype(compute_dtype)
    approx_recip = compute_dtype != jnp.dtype(jnp.float32)

    # Lane dims padded to multiples of 128 only when needed (no-op for ViT dims).
    Hp = _round_up(H, 128)
    Fp = _round_up(F, 128)
    lane_pad = (Hp != H) or (Fp != F)

    # FF-chunk size: largest multiple of 128 that divides Fp and is <= ff_chunk.
    if ff_chunk is None:
        fc = Fp
    else:
        fc = min(Fp, max(128, _round_up(min(ff_chunk, Fp), 128)))
        while Fp % fc != 0:
            fc -= 128
    n_chunks = Fp // fc

    c_item = compute_dtype.itemsize
    o_item = jnp.dtype(out_dtype).itemsize
    sub = max(8, 32 // max(1, c_item))      # sublane granularity for compute dtype

    # ---- generation-aware VMEM budget & row-tile choice ----------------------
    cap, num_tc = _tpu_generation_info()
    # Resident, single-buffered weights + f32 biases.
    weight_bytes = (Hp * Fp + Fp * Hp) * c_item + (Fp + Hp) * 4
    # Per-row live bytes: double-buffered x & out tiles, f32 accumulator, f32
    # FF-chunk intermediate + its compute-dtype downcast; +25% headroom for
    # Mosaic internal scratch / spills.
    per_row = (2 * Hp * c_item + 2 * Hp * o_item + Hp * 4
               + 2 * fc * 4 + fc * c_item)
    per_row = int(per_row * 1.25)
    row_budget = max(2 << 20, int(0.80 * cap) - weight_bytes)
    cap_rows = max(sub, (row_budget // per_row) // sub * sub)

    tm = min(tile_m, cap_rows, _round_up(rows, sub))
    tm = max(sub, tm // sub * sub)

    # v7x only: keep an even number of "parallel" grid steps so both
    # TensorCores get balanced work; single-TC chips keep one big tile.
    n_steps = pl.cdiv(rows, tm)
    if num_tc >= 2 and rows > sub and n_steps % 2 == 1:
        tm = max(sub, _round_up(pl.cdiv(rows, n_steps + 1), sub))
        n_steps = pl.cdiv(rows, tm)
    grid = (n_steps,)

    # ---- operand prep (views / casts only; pads only when lanes misaligned) --
    x2d = x.reshape(rows, H)
    if lane_pad:
        # Zero padding is exact: padded input cols / weight rows contribute 0,
        # padded output cols are sliced off below.
        x2d = jnp.pad(x2d, ((0, 0), (0, Hp - H)))
        w1 = jnp.pad(w1, ((0, Hp - H), (0, Fp - F)))
        w2 = jnp.pad(w2, ((0, Fp - F), (0, Hp - H)))
        b1 = jnp.pad(b1, (0, Fp - F))
        b2 = jnp.pad(b2, (0, Hp - H))
    x2d = x2d.astype(compute_dtype)
    w1p = w1.astype(compute_dtype)
    w2p = w2.astype(compute_dtype)
    b1p = b1.astype(jnp.float32).reshape(1, Fp)
    b2p = b2.astype(jnp.float32).reshape(1, Hp)

    cost = pl.CostEstimate(
        flops=4 * rows * Hp * Fp,                     # two matmuls
        transcendentals=2 * rows * Fp,                # exp + reciprocal per elem
        bytes_accessed=(rows * Hp * (c_item + o_item)
                        + (Hp * Fp + Fp * Hp) * c_item + (Fp + Hp) * 4),
    )

    working_set = weight_bytes + tm * per_row
    vmem_limit = int(min(max(32 << 20, int(working_set * 1.2)), int(0.9 * cap)))

    resident = pl.Buffered(1)          # invariant operands: no double-buffering
    kernel = _make_kernel(n_chunks, fc, compute_dtype, approx_recip)

    # TODO(synk): if the weights don't fit VMEM (very large H*F), tile the
    # weight dims across the grid instead of keeping them resident.
    # TODO(synk): per-layer callers could prefetch the next layer's weights via
    # a cross-pallas_call DMA future (P10) to hide the step-0 weight DMA.
    out2d = pl.pallas_call(
        kernel,
        out_shape=jax.ShapeDtypeStruct((rows, Hp), out_dtype),
        grid_spec=pltpu.PrefetchScalarGridSpec(
            num_scalar_prefetch=0,
            grid=grid,
            in_specs=[
                pl.BlockSpec((tm, Hp), lambda i: (i, 0)),                          # x rows
                pl.BlockSpec((Hp, Fp), lambda i: (0, 0), pipeline_mode=resident),  # w1
                pl.BlockSpec((1, Fp), lambda i: (0, 0), pipeline_mode=resident),   # b1
                pl.BlockSpec((Fp, Hp), lambda i: (0, 0), pipeline_mode=resident),  # w2
                pl.BlockSpec((1, Hp), lambda i: (0, 0), pipeline_mode=resident),   # b2
            ],
            out_specs=pl.BlockSpec((tm, Hp), lambda i: (i, 0)),
            scratch_shapes=[pltpu.VMEM((tm, Hp), jnp.float32)],
        ),
        compiler_params=pltpu.CompilerParams(
            dimension_semantics=("parallel",),
            vmem_limit_bytes=vmem_limit),
        cost_estimate=cost,
    )(x2d, w1p, b1p, w2p, b2p)

    if lane_pad:
        out2d = out2d[:, :H]
    return out2d.reshape(B, S, H)


if __name__ == "__main__":
    # Small shapes consistent with a ViT block: batch=2, seq=8, hidden=32, ff=128
    B, S, H, F = 2, 8, 32, 128

    key = jax.random.PRNGKey(0)
    kx, k1, kb1, k2, kb2 = jax.random.split(key, 5)

    x = jax.random.normal(kx, (B, S, H), dtype=jnp.float32)
    # Deterministic synthetic parameters (no checkpoint loading).
    w1 = jax.random.normal(k1, (H, F), dtype=jnp.float32) * (1.0 / jnp.sqrt(H))
    b1 = jax.random.normal(kb1, (F,), dtype=jnp.float32) * 0.01
    w2 = jax.random.normal(k2, (F, H), dtype=jnp.float32) * (1.0 / jnp.sqrt(F))
    b2 = jax.random.normal(kb2, (H,), dtype=jnp.float32) * 0.01

    # Pure-JAX reference of ResidualAdd(fn)(x) = fn(x) + x, exact (erf) GELU
    # to match torch.nn.GELU's default.
    ref = jax.nn.gelu(x @ w1 + b1, approximate=False) @ w2 + b2 + x

    # 1) Default perf path: bf16 MXU operands, f32 accumulation.
    out_bf16 = jax.block_until_ready(residual_add_mlp(x, w1, b1, w2, b2))
    assert out_bf16.shape == x.shape and out_bf16.dtype == x.dtype
    assert jnp.allclose(out_bf16, ref, atol=5e-2, rtol=5e-2), "bf16 path mismatch"

    # 2) Full-precision compute path (tight numerical check).
    out_f32 = jax.block_until_ready(
        residual_add_mlp(x, w1, b1, w2, b2, compute_dtype=jnp.float32))
    assert jnp.allclose(out_f32, ref, atol=2e-4, rtol=2e-4), "f32 path mismatch"

    # 3) Exercise the in-kernel FF-chunked accumulation path (n_chunks > 1).
    F2 = 256
    k3, kb3, k4, kb4 = jax.random.split(jax.random.PRNGKey(1), 4)
    w1b = jax.random.normal(k3, (H, F2), dtype=jnp.float32) * (1.0 / jnp.sqrt(H))
    b1b = jax.random.normal(kb3, (F2,), dtype=jnp.float32) * 0.01
    w2b = jax.random.normal(k4, (F2, H), dtype=jnp.float32) * (1.0 / jnp.sqrt(F2))
    b2b = jax.random.normal(kb4, (H,), dtype=jnp.float32) * 0.01
    refb = jax.nn.gelu(x @ w1b + b1b, approximate=False) @ w2b + b2b + x
    outb = jax.block_until_ready(
        residual_add_mlp(x, w1b, b1b, w2b, b2b,
                         compute_dtype=jnp.float32, ff_chunk=128))
    assert jnp.allclose(outb, refb, atol=2e-4, rtol=2e-4), "chunked path mismatch"

    print("KERNEL_OK")
</pallas_src>

<mosaic_0001>
module attributes {stable_mosaic.version = 11 : i64} {
  func.func @kernel(%arg0: i32, %arg1: memref<16x128xbf16, #tpu.memory_space<vmem>>, %arg2: memref<128x128xbf16, #tpu.memory_space<vmem>>, %arg3: memref<1x128xf32, #tpu.memory_space<vmem>>, %arg4: memref<128x128xbf16, #tpu.memory_space<vmem>>, %arg5: memref<1x128xf32, #tpu.memory_space<vmem>>, %arg6: memref<16x128xf32, #tpu.memory_space<vmem>>, %arg7: memref<16x128xf32, #tpu.memory_space<vmem>>) attributes {dimension_semantics = [#tpu.dimension_semantics<parallel>], iteration_bounds = array<i64: 1>, scalar_prefetch = 0 : i64, scratch_operands = 1 : i64, tpu.core_type = #tpu.core_type<tc>, window_params = [{transform_indices = @transform_0, window_bounds = array<i64: 16, 128>}, {pipeline_mode = #tpu.pipeline_mode<synchronous>, transform_indices = @transform_1, window_bounds = array<i64: 128, 128>}, {pipeline_mode = #tpu.pipeline_mode<synchronous>, transform_indices = @transform_2, window_bounds = array<i64: 1, 128>}, {pipeline_mode = #tpu.pipeline_mode<synchronous>, transform_indices = @transform_3, window_bounds = array<i64: 128, 128>}, {pipeline_mode = #tpu.pipeline_mode<synchronous>, transform_indices = @transform_4, window_bounds = array<i64: 1, 128>}, {transform_indices = @transform_5, window_bounds = array<i64: 16, 128>}]} {
    %c0 = arith.constant 0 : index
    %c0_0 = arith.constant 0 : index
    %0 = vector.load %arg1[%c0, %c0_0] : memref<16x128xbf16, #tpu.memory_space<vmem>>, vector<16x128xbf16>
    %1 = arith.extf %0 : vector<16x128xbf16> to vector<16x128xf32>
    %c0_1 = arith.constant 0 : index
    %c0_2 = arith.constant 0 : index
    %2 = vector.load %arg5[%c0_1, %c0_2] : memref<1x128xf32, #tpu.memory_space<vmem>>, vector<1x128xf32>
    %3 = vector.broadcast %2 : vector<1x128xf32> to vector<16x128xf32>
    %4 = arith.addf %1, %3 : vector<16x128xf32>
    %c0_3 = arith.constant 0 : index
    %c0_4 = arith.constant 0 : index
    %5 = vector.load %arg7[%c0_3, %c0_4] : memref<16x128xf32, #tpu.memory_space<vmem>>, vector<16x128xf32>
    tpu.vector_store %arg7[%c0_3, %c0_4], %4 {strides = array<i32>} : memref<16x128xf32, #tpu.memory_space<vmem>>, vector<16x128xf32>,
    %c0_5 = arith.constant 0 : index
    %c0_6 = arith.constant 0 : index
    %6 = vector.load %arg2[%c0_5, %c0_6] : memref<128x128xbf16, #tpu.memory_space<vmem>>, vector<128x128xbf16>
    %cst = arith.constant dense<0.000000e+00> : vector<16x128xf32>
    %7 = tpu.matmul %0, %6, %cst {dimension_numbers = #tpu.dot_dimension_numbers<[1], [0], [0], [1], [0, 0, 1, 1], [], []>} : vector<16x128xbf16>, vector<128x128xbf16>, vector<16x128xf32> -> vector<16x128xf32>
    %c0_7 = arith.constant 0 : index
    %c0_8 = arith.constant 0 : index
    %8 = vector.load %arg3[%c0_7, %c0_8] : memref<1x128xf32, #tpu.memory_space<vmem>>, vector<1x128xf32>
    %9 = vector.broadcast %8 : vector<1x128xf32> to vector<16x128xf32>
    %10 = arith.addf %7, %9 : vector<16x128xf32>
    %11 = math.absf %10 : vector<16x128xf32>
    %cst_9 = arith.constant 0.707106769 : f32
    %12 = vector.broadcast %cst_9 : f32 to vector<16x128xf32>
    %13 = arith.mulf %11, %12 : vector<16x128xf32>
    %cst_10 = arith.constant 0.327591091 : f32
    %14 = vector.broadcast %cst_10 : f32 to vector<16x128xf32>
    %15 = arith.mulf %14, %13 : vector<16x128xf32>
    %cst_11 = arith.constant 1.000000e+00 : f32
    %16 = vector.broadcast %cst_11 : f32 to vector<16x128xf32>
    %17 = arith.addf %16, %15 : vector<16x128xf32>
    %18 = tpu.reciprocal %17 {approx = true} : vector<16x128xf32> -> vector<16x128xf32>
    %cst_12 = arith.constant 1.06140542 : f32
    %19 = vector.broadcast %cst_12 : f32 to vector<16x128xf32>
    %20 = arith.mulf %19, %18 : vector<16x128xf32>
    %cst_13 = arith.constant -1.45315206 : f32
    %21 = vector.broadcast %cst_13 : f32 to vector<16x128xf32>
    %22 = arith.addf %20, %21 : vector<16x128xf32>
    %23 = arith.mulf %22, %18 : vector<16x128xf32>
    %cst_14 = arith.constant 1.42141378 : f32
    %24 = vector.broadcast %cst_14 : f32 to vector<16x128xf32>
    %25 = arith.addf %23, %24 : vector<16x128xf32>
    %26 = arith.mulf %25, %18 : vector<16x128xf32>
    %cst_15 = arith.constant -0.284496725 : f32
    %27 = vector.broadcast %cst_15 : f32 to vector<16x128xf32>
    %28 = arith.addf %26, %27 : vector<16x128xf32>
    %29 = arith.mulf %28, %18 : vector<16x128xf32>
    %cst_16 = arith.constant 0.254829586 : f32
    %30 = vector.broadcast %cst_16 : f32 to vector<16x128xf32>
    %31 = arith.addf %29, %30 : vector<16x128xf32>
    %32 = arith.mulf %31, %18 : vector<16x128xf32>
    %cst_17 = arith.constant 5.000000e-01 : f32
    %33 = vector.broadcast %cst_17 : f32 to vector<16x128xf32>
    %34 = arith.mulf %33, %10 : vector<16x128xf32>
    %35 = arith.mulf %34, %32 : vector<16x128xf32>
    %36 = arith.mulf %13, %13 : vector<16x128xf32>
    %cst_18 = arith.constant 0.000000e+00 : f32
    %37 = vector.broadcast %cst_18 : f32 to vector<16x128xf32>
    %38 = arith.subf %37, %36 : vector<16x128xf32>
    %39 = math.exp %38 : vector<16x128xf32>
    %40 = arith.mulf %35, %39 : vector<16x128xf32>
    %cst_19 = arith.constant 0.000000e+00 : f32
    %41 = vector.broadcast %cst_19 : f32 to vector<16x128xf32>
    %42 = arith.cmpf oge, %10, %41 : vector<16x128xf32>
    %43 = arith.subf %10, %40 : vector<16x128xf32>
    %44 = arith.select %42, %43, %40 : vector<16x128xi1>, vector<16x128xf32>
    %c0_20 = arith.constant 0 : index
    %c0_21 = arith.constant 0 : index
    %45 = vector.load %arg7[%c0_20, %c0_21] : memref<16x128xf32, #tpu.memory_space<vmem>>, vector<16x128xf32>
    %46 = arith.truncf %44 : vector<16x128xf32> to vector<16x128xbf16>
    %c0_22 = arith.constant 0 : index
    %c0_23 = arith.constant 0 : index
    %47 = vector.load %arg4[%c0_22, %c0_23] : memref<128x128xbf16, #tpu.memory_space<vmem>>, vector<128x128xbf16>
    %cst_24 = arith.constant dense<0.000000e+00> : vector<16x128xf32>
    %48 = tpu.matmul %46, %47, %cst_24 {dimension_numbers = #tpu.dot_dimension_numbers<[1], [0], [0], [1], [0, 0, 1, 1], [], []>} : vector<16x128xbf16>, vector<128x128xbf16>, vector<16x128xf32> -> vector<16x128xf32>
    %49 = arith.addf %45, %48 : vector<16x128xf32>
    %c0_25 = arith.constant 0 : index
    %c0_26 = arith.constant 0 : index
    %50 = vector.load %arg7[%c0_25, %c0_26] : memref<16x128xf32, #tpu.memory_space<vmem>>, vector<16x128xf32>
    tpu.vector_store %arg7[%c0_25, %c0_26], %49 {strides = array<i32>} : memref<16x128xf32, #tpu.memory_space<vmem>>, vector<16x128xf32>,
    %c0_27 = arith.constant 0 : index
    %c0_28 = arith.constant 0 : index
    %51 = vector.load %arg7[%c0_27, %c0_28] : memref<16x128xf32, #tpu.memory_space<vmem>>, vector<16x128xf32>
    %c0_29 = arith.constant 0 : index
    %c0_30 = arith.constant 0 : index
    %52 = vector.load %arg6[%c0_29, %c0_30] : memref<16x128xf32, #tpu.memory_space<vmem>>, vector<16x128xf32>
    tpu.vector_store %arg6[%c0_29, %c0_30], %51 {strides = array<i32>} : memref<16x128xf32, #tpu.memory_space<vmem>>, vector<16x128xf32>,
    return
  }
  func.func @transform_0(%arg0: i32) -> (i32, i32) {
    %c0_i32 = arith.constant 0 : i32
    %c0_i32_0 = arith.constant 0 : i32
    return %arg0, %c0_i32 : i32, i32
  }
  func.func @transform_1(%arg0: i32) -> (i32, i32) {
    %c0_i32 = arith.constant 0 : i32
    %c0_i32_0 = arith.constant 0 : i32
    %c0_i32_1 = arith.constant 0 : i32
    return %c0_i32, %c0_i32_0 : i32, i32
  }
  func.func @transform_2(%arg0: i32) -> (i32, i32) {
    %c0_i32 = arith.constant 0 : i32
    %c0_i32_0 = arith.constant 0 : i32
    %c0_i32_1 = arith.constant 0 : i32
    return %c0_i32, %c0_i32_0 : i32, i32
  }
  func.func @transform_3(%arg0: i32) -> (i32, i32) {
    %c0_i32 = arith.constant 0 : i32
    %c0_i32_0 = arith.constant 0 : i32
    %c0_i32_1 = arith.constant 0 : i32
    return %c0_i32, %c0_i32_0 : i32, i32
  }
  func.func @transform_4(%arg0: i32) -> (i32, i32) {
    %c0_i32 = arith.constant 0 : i32
    %c0_i32_0 = arith.constant 0 : i32
    %c0_i32_1 = arith.constant 0 : i32
    return %c0_i32, %c0_i32_0 : i32, i32
  }
  func.func @transform_5(%arg0: i32) -> (i32, i32) {
    %c0_i32 = arith.constant 0 : i32
    %c0_i32_0 = arith.constant 0 : i32
    return %arg0, %c0_i32 : i32, i32
  }
}

</mosaic_0001>

<llo_original>
// kernel: tpu_custom_call.1
$region0: #{tpu_custom_call.1}
  #allocation0 [shape = 'u32[]', space=smem, size = 0x4, offset = 0x4, fixed_abs, tag = 'smem constant byte address 0x4 - core index']
  #allocation1 [shape = 'u32[144,128]{1,0:T(1,128)}', space=vmem, size = 0x12000, scoped, tag = 'internal scratch']
  #allocation2 [shape = 'f32[16,128]{1,0:T(8,128)}', space=vmem, size = 0x2000, scoped, tag = 'scratch operand']
  %s0 = inlined_call_operand.hbm [shape: bf16[16,128], index: 0, kind: input, shape index: {}]
  %s1 = inlined_call_operand.hbm [shape: bf16[128,128], index: 1, kind: input, shape index: {}]
  %s2 = inlined_call_operand.vmem [shape: f32[1,128], index: 2, kind: input, shape index: {}]
  %s3 = inlined_call_operand.hbm [shape: bf16[128,128], index: 3, kind: input, shape index: {}]
  %s4 = inlined_call_operand.vmem [shape: f32[1,128], index: 4, kind: input, shape index: {}]
  %s5 = inlined_call_operand.hbm [shape: f32[16,128], index: 5, kind: output, shape index: {}]
  %s6 = sld [smem:[#allocation0]]
  $region42: #{tpu_custom_call.1} parent=0
    _
  %s8 = ssub.s32 1, %s6
  %s9 = scalar_select 0, %s8, %s6
  $region1: #{tpu_custom_call.1} parent=0
    #allocation3 [shape = 'u8[4096]{0}', space=vmem, size = 0x1000, scoped, tag = 'input window, operand 0, single buffered']
    #allocation4 [shape = 's32[1]{0}', space=sflag, size = 0x4, scoped, tag = 'scoped memory for tpu_custom_call.1']
    #allocation5 [shape = 's32[1]{0}', space=sflag, size = 0x4, scoped, tag = 'scoped memory for tpu_custom_call.1']
    #allocation6 [shape = 'u8[32768]{0}', space=vmem, size = 0x8000, scoped, tag = 'input window, operand 1, single buffered']
    #allocation7 [shape = 's32[1]{0}', space=sflag, size = 0x4, scoped, tag = 'scoped memory for tpu_custom_call.1']
    #allocation8 [shape = 'u8[32768]{0}', space=vmem, size = 0x8000, scoped, tag = 'input window, operand 3, single buffered']
    #allocation9 [shape = 'u8[8192]{0}', space=vmem, size = 0x2000, scoped, tag = 'output window, operand 0, single buffered']
    %10 = vsyncpa [#allocation4], 0
    %11 = vsyncpa [#allocation7], 0
    %12 = vsyncpa [#allocation5], 0
    // Predicated region
    $region2: #{tpu_custom_call.1} parent=1 // pred_check
      _
    $region3: #{tpu_custom_call.1} parent=1 // pred_check_branch
      %14 = sbr.rel (0) target = $region5
    $region4: #{tpu_custom_call.1} parent=1 // pred_region
      %s16 = ssub.s32 128, 128
      %17 = vsyncadd [#allocation4], %s16
      %s18 = sshll.u32 [#allocation3], 4
      %s19 = int_to_ptr.vmem [resolvable:$true] %s18
      %24 = dma.hbm_to_vmem [thread:$0]  %s0, 128, %s19, [#allocation4], 64, 64, 4
    $region5: #{tpu_custom_call.1} parent=1 // pred_fallthru
      _
    // Predicated region
    $region6: #{tpu_custom_call.1} parent=1 // pred_check
      _
    $region7: #{tpu_custom_call.1} parent=1 // pred_check_branch
      %26 = sbr.rel (0) target = $region9
    $region8: #{tpu_custom_call.1} parent=1 // pred_region
      %s28 = ssub.s32 1024, 1024
      %29 = vsyncadd [#allocation7], %s28
      %s30 = sshll.u32 [#allocation6], 4
      %s31 = int_to_ptr.vmem [resolvable:$true] %s30
      %36 = dma.hbm_to_vmem [thread:$0]  %s1, 1024, %s31, [#allocation7], 64, 64, 4
    $region9: #{tpu_custom_call.1} parent=1 // pred_fallthru
      _
    // Predicated region
    $region10: #{tpu_custom_call.1} parent=1 // pred_check
      _
    $region11: #{tpu_custom_call.1} parent=1 // pred_check_branch
      %38 = sbr.rel (0) target = $region13
    $region12: #{tpu_custom_call.1} parent=1 // pred_region
      _
    $region13: #{tpu_custom_call.1} parent=1 // pred_fallthru
      _
    // Predicated region
    $region14: #{tpu_custom_call.1} parent=1 // pred_check
      _
    $region15: #{tpu_custom_call.1} parent=1 // pred_check_branch
      %40 = sbr.rel (0) target = $region17
    $region16: #{tpu_custom_call.1} parent=1 // pred_region
      %s42 = ssub.s32 1024, 1024
      %43 = vsyncadd [#allocation7], %s42
      %s44 = sshll.u32 [#allocation8], 4
      %s45 = int_to_ptr.vmem [resolvable:$true] %s44
      %50 = dma.hbm_to_vmem [thread:$0]  %s3, 1024, %s45, [#allocation7], 64, 64, 4
    $region17: #{tpu_custom_call.1} parent=1 // pred_fallthru
      _
    // Predicated region
    $region18: #{tpu_custom_call.1} parent=1 // pred_check
      _
    $region19: #{tpu_custom_call.1} parent=1 // pred_check_branch
      %52 = sbr.rel (0) target = $region21
    $region20: #{tpu_custom_call.1} parent=1 // pred_region
      _
    $region21: #{tpu_custom_call.1} parent=1 // pred_fallthru
      _
    // Predicated region
    $region22: #{tpu_custom_call.1} parent=1 // pred_check
      _
    $region23: #{tpu_custom_call.1} parent=1 // pred_check_branch
      %54 = sbr.rel (0) target = $region25
    $region24: #{tpu_custom_call.1} parent=1 // pred_region
      %55 = dma.done [#allocation4], 128
    $region25: #{tpu_custom_call.1} parent=1 // pred_fallthru
      _
    // Predicated region
    $region26: #{tpu_custom_call.1} parent=1 // pred_check
      _
    $region27: #{tpu_custom_call.1} parent=1 // pred_check_branch
      %57 = sbr.rel (0) target = $region29
    $region28: #{tpu_custom_call.1} parent=1 // pred_region
      %58 = dma.done [#allocation7], 1024
    $region29: #{tpu_custom_call.1} parent=1 // pred_fallthru
      _
    // Predicated region
    $region30: #{tpu_custom_call.1} parent=1 // pred_check
      _
    $region31: #{tpu_custom_call.1} parent=1 // pred_check_branch
      %60 = sbr.rel (0) target = $region33
    $region32: #{tpu_custom_call.1} parent=1 // pred_region
      %61 = dma.done [#allocation7], 1024
    $region33: #{tpu_custom_call.1} parent=1 // pred_fallthru
      _
    %v63 = vld [vmem:[#allocation3] sm:$0xf]
    %v64 = vld [vmem:[#allocation3 + $0x4] sm:$0xf]
    %v65 = vunpack.c.l.bf16 %v63
    %v66 = vunpack.c.l.bf16 %v64
    %v67 = vld [vmem:[%s4] sm:$0x1]
    %v69 = vlaneseq
    %v70 = vshrl.u32 %v69, 7
    %v71 = vsub.s32 0, %v70
    %v72 = vrot.slane %v67, %v71
    %v74 = vadd.f32 %v65, %v72
    %v75 = vadd.f32 %v66, %v72
    %76 = vst [vmem:[#allocation2] sm:$0xff] %v74
    %77 = vst [vmem:[#allocation2 + $0x8] sm:$0xff] %v75
    %v78 = vld [vmem:[#allocation6] sm:$0xf]
    %v79 = vld [vmem:[#allocation6 + $0x4] sm:$0xf]
    %v80 = vld [vmem:[#allocation6 + $0x8] sm:$0xf]
    %v81 = vld [vmem:[#allocation6 + $0xc] sm:$0xf]
    %v82 = vld [vmem:[#allocation6 + $0x10] sm:$0xf]
    %v83 = vld [vmem:[#allocation6 + $0x14] sm:$0xf]
    %v84 = vld [vmem:[#allocation6 + $0x18] sm:$0xf]
    %v85 = vld [vmem:[#allocation6 + $0x1c] sm:$0xf]
    %v86 = vld [vmem:[#allocation6 + $0x20] sm:$0xf]
    %v87 = vld [vmem:[#allocation6 + $0x24] sm:$0xf]
    %v88 = vld [vmem:[#allocation6 + $0x28] sm:$0xf]
    %v89 = vld [vmem:[#allocation6 + $0x2c] sm:$0xf]
    %v90 = vld [vmem:[#allocation6 + $0x30] sm:$0xf]
    %v91 = vld [vmem:[#allocation6 + $0x34] sm:$0xf]
    %v92 = vld [vmem:[#allocation6 + $0x38] sm:$0xf]
    %v93 = vld [vmem:[#allocation6 + $0x3c] sm:$0xf]
    %v94 = vld [vmem:[%s2] sm:$0x1]
    %v96 = vlaneseq
    %v97 = vshrl.u32 %v96, 7
    %v98 = vsub.s32 0, %v97
    %v99 = vrot.slane %v94, %v98
    %v103 = vunpack.c.l.b16 %v63
    %v104 = vunpack.c.l.b16 %v64
    %v105 = vpack.c.b16 %v104, %v103
    %v123 = vunpack.c.l.b16 %v78
    %v124 = vunpack.c.l.b16 %v79
    %v125 = vunpack.c.l.b16 %v80
    %v126 = vunpack.c.l.b16 %v81
    %v127 = vunpack.c.l.b16 %v82
    %v128 = vunpack.c.l.b16 %v83
    %v129 = vunpack.c.l.b16 %v84
    %v130 = vunpack.c.l.b16 %v85
    %v131 = vunpack.c.l.b16 %v86
    %v132 = vunpack.c.l.b16 %v87
    %v133 = vunpack.c.l.b16 %v88
    %v134 = vunpack.c.l.b16 %v89
    %v135 = vunpack.c.l.b16 %v90
    %v136 = vunpack.c.l.b16 %v91
    %v137 = vunpack.c.l.b16 %v92
    %v138 = vunpack.c.l.b16 %v93
    %v139 = vpack.c.b16 %v124, %v123
    %v140 = vpack.c.b16 %v126, %v125
    %v141 = vpack.c.b16 %v128, %v127
    %v142 = vpack.c.b16 %v130, %v129
    %v143 = vpack.c.b16 %v132, %v131
    %v144 = vpack.c.b16 %v134, %v133
    %v145 = vpack.c.b16 %v136, %v135
    %v146 = vpack.c.b16 %v138, %v137
    %155 = vmatprep.subr.bf16.mxu0 0
    %156 = vmatpush1.bf16.msra.mxu0 %v146
    %157 = vmatprep.subr.bf16.mxu0 0
    %158 = vmatpush1.bf16.msra.mxu0 %v145
    %159 = vmatprep.subr.bf16.mxu0 0
    %160 = vmatpush1.bf16.msra.mxu0 %v144
    %161 = vmatprep.subr.bf16.mxu0 0
    %162 = vmatpush1.bf16.msra.mxu0 %v143
    %163 = vmatprep.subr.bf16.mxu0 0
    %164 = vmatpush1.bf16.msra.mxu0 %v142
    %165 = vmatprep.subr.bf16.mxu0 0
    %166 = vmatpush1.bf16.msra.mxu0 %v141
    %167 = vmatprep.subr.bf16.mxu0 0
    %168 = vmatpush1.bf16.msra.mxu0 %v140
    %169 = vmatprep.subr.bf16.mxu0 0
    %170 = vmatpush1.bf16.msra.mxu0 %v139
    %171 = vmatprep.subr.bf16.mxu0 0
    %172 = vmatpush2.bf16.msra.mxu0 0
    %173 = vmatprep.subr.bf16.mxu0 0
    %174 = vmatpush2.bf16.msra.mxu0 0
    %175 = vmatprep.subr.bf16.mxu0 0
    %176 = vmatpush2.bf16.msra.mxu0 0
    %177 = vmatprep.subr.bf16.mxu0 0
    %178 = vmatpush2.bf16.msra.mxu0 0
    %179 = vmatprep.subr.bf16.mxu0 0
    %180 = vmatpush2.bf16.msra.mxu0 0
    %181 = vmatprep.subr.bf16.mxu0 0
    %182 = vmatpush2.bf16.msra.mxu0 0
    %183 = vmatprep.subr.bf16.mxu0 0
    %184 = vmatpush2.bf16.msra.mxu0 0
    %185 = vmatprep.subr.bf16.mxu0 0
    %186 = vmatpush2.bf16.msra.mxu0 0
    %187 = vmatprep.mubr.bf16.mxu0 0
    %188 = vmatmul.mubr.bf16.gmra.mxu0 %v105
    %v189 = vpop.f32.mrf.mxu0
    %v190 = vadd.f32 %v99, %v189
    %v191 = vpop.f32.mrf.mxu0
    %v192 = vpop.f32.mrf.mxu0
    %v193 = vadd.f32 %v99, %v192
    %v194 = vpop.f32.mrf.mxu0
    %195 = vdwg.mxu0
    %v196 = vand.u32 2147483647, %v190
    %v197 = vand.u32 2147483647, %v193
    %v198 = vmul.f32 %v196, 0.70710677
    %v199 = vmul.f32 %v197, 0.70710677
    %v200 = vmul.f32 %v198, 0.3275911
    %v201 = vmul.f32 %v199, 0.3275911
    %v202 = vadd.f32 %v200, 1.0
    %v203 = vadd.f32 %v201, 1.0
    %v204 = vrcp.pop %v202
    %v205 = vrcp.pop %v203
    %v206 = vmul.f32 %v204, 1.0614054
    %v207 = vmul.f32 %v205, 1.0614054
    %v208 = vadd.f32 %v206, -1.4531521
    %v209 = vadd.f32 %v207, -1.4531521
    %v210 = vmul.f32 %v208, %v204
    %v211 = vmul.f32 %v209, %v205
    %v212 = vadd.f32 %v210, 1.4214138
    %v213 = vadd.f32 %v211, 1.4214138
    %v214 = vmul.f32 %v212, %v204
    %v215 = vmul.f32 %v213, %v205
    %v216 = vadd.f32 %v214, -0.28449672
    %v217 = vadd.f32 %v215, -0.28449672
    %v218 = vmul.f32 %v216, %v204
    %v219 = vmul.f32 %v217, %v205
    %v220 = vadd.f32 %v218, 0.2548296
    %v221 = vadd.f32 %v219, 0.2548296
    %v222 = vmul.f32 %v220, %v204
    %v223 = vmul.f32 %v221, %v205
    %v224 = vmul.f32 %v190, 0.5
    %v225 = vmul.f32 %v193, 0.5
    %v226 = vmul.f32 %v224, %v222
    %v227 = vmul.f32 %v225, %v223
    %v228 = vmul.f32 %v198, %v198
    %v229 = vmul.f32 %v199, %v199
    %v230 = vsub.f32 0.0, %v228
    %v231 = vsub.f32 0.0, %v229
    %v232 = vmul.f32 %v230, 1.442695
    %v233 = vpow.pop %v232
    %v234 = vmul.f32 %v231, 1.442695
    %v235 = vpow.pop %v234
    %v236 = vmul.f32 %v226, %v233
    %v237 = vmul.f32 %v227, %v235
    %vm238 = vcmp.ge.f32.partialorder %v190, 0.0
    %vm239 = vcmp.ge.f32.partialorder %v193, 0.0
    %v240 = vsub.f32 %v190, %v236
    %v241 = vsub.f32 %v193, %v237
    %v242 = vsel %vm238, %v240, %v236
    %v243 = vsel %vm239, %v241, %v237
    %v244 = vld [vmem:[#allocation2] sm:$0xff]
    %v245 = vld [vmem:[#allocation2 + $0x8] sm:$0xff]
    %v246 = vpack.c.bf16 %v243, %v242
    %v247 = vld [vmem:[#allocation8] sm:$0xf]
    %v248 = vld [vmem:[#allocation8 + $0x4] sm:$0xf]
    %v249 = vld [vmem:[#allocation8 + $0x8] sm:$0xf]
    %v250 = vld [vmem:[#allocation8 + $0xc] sm:$0xf]
    %v251 = vld [vmem:[#allocation8 + $0x10] sm:$0xf]
    %v252 = vld [vmem:[#allocation8 + $0x14] sm:$0xf]
    %v253 = vld [vmem:[#allocation8 + $0x18] sm:$0xf]
    %v254 = vld [vmem:[#allocation8 + $0x1c] sm:$0xf]
    %v255 = vld [vmem:[#allocation8 + $0x20] sm:$0xf]
    %v256 = vld [vmem:[#allocation8 + $0x24] sm:$0xf]
    %v257 = vld [vmem:[#allocation8 + $0x28] sm:$0xf]
    %v258 = vld [vmem:[#allocation8 + $0x2c] sm:$0xf]
    %v259 = vld [vmem:[#allocation8 + $0x30] sm:$0xf]
    %v260 = vld [vmem:[#allocation8 + $0x34] sm:$0xf]
    %v261 = vld [vmem:[#allocation8 + $0x38] sm:$0xf]
    %v262 = vld [vmem:[#allocation8 + $0x3c] sm:$0xf]
    %v279 = vunpack.c.l.b16 %v247
    %v280 = vunpack.c.l.b16 %v248
    %v281 = vunpack.c.l.b16 %v249
    %v282 = vunpack.c.l.b16 %v250
    %v283 = vunpack.c.l.b16 %v251
    %v284 = vunpack.c.l.b16 %v252
    %v285 = vunpack.c.l.b16 %v253
    %v286 = vunpack.c.l.b16 %v254
    %v287 = vunpack.c.l.b16 %v255
    %v288 = vunpack.c.l.b16 %v256
    %v289 = vunpack.c.l.b16 %v257
    %v290 = vunpack.c.l.b16 %v258
    %v291 = vunpack.c.l.b16 %v259
    %v292 = vunpack.c.l.b16 %v260
    %v293 = vunpack.c.l.b16 %v261
    %v294 = vunpack.c.l.b16 %v262
    %v295 = vpack.c.b16 %v280, %v279
    %v296 = vpack.c.b16 %v282, %v281
    %v297 = vpack.c.b16 %v284, %v283
    %v298 = vpack.c.b16 %v286, %v285
    %v299 = vpack.c.b16 %v288, %v287
    %v300 = vpack.c.b16 %v290, %v289
    %v301 = vpack.c.b16 %v292, %v291
    %v302 = vpack.c.b16 %v294, %v293
    %311 = vmatprep.subr.bf16.mxu0 0
    %312 = vmatpush1.bf16.msra.mxu0 %v302
    %313 = vmatprep.subr.bf16.mxu0 0
    %314 = vmatpush1.bf16.msra.mxu0 %v301
    %315 = vmatprep.subr.bf16.mxu0 0
    %316 = vmatpush1.bf16.msra.mxu0 %v300
    %317 = vmatprep.subr.bf16.mxu0 0
    %318 = vmatpush1.bf16.msra.mxu0 %v299
    %319 = vmatprep.subr.bf16.mxu0 0
    %320 = vmatpush1.bf16.msra.mxu0 %v298
    %321 = vmatprep.subr.bf16.mxu0 0
    %322 = vmatpush1.bf16.msra.mxu0 %v297
    %323 = vmatprep.subr.bf16.mxu0 0
    %324 = vmatpush1.bf16.msra.mxu0 %v296
    %325 = vmatprep.subr.bf16.mxu0 0
    %326 = vmatpush1.bf16.msra.mxu0 %v295
    %327 = vmatprep.subr.bf16.mxu0 0
    %328 = vmatpush2.bf16.msra.mxu0 0
    %329 = vmatprep.subr.bf16.mxu0 0
    %330 = vmatpush2.bf16.msra.mxu0 0
    %331 = vmatprep.subr.bf16.mxu0 0
    %332 = vmatpush2.bf16.msra.mxu0 0
    %333 = vmatprep.subr.bf16.mxu0 0
    %334 = vmatpush2.bf16.msra.mxu0 0
    %335 = vmatprep.subr.bf16.mxu0 0
    %336 = vmatpush2.bf16.msra.mxu0 0
    %337 = vmatprep.subr.bf16.mxu0 0
    %338 = vmatpush2.bf16.msra.mxu0 0
    %339 = vmatprep.subr.bf16.mxu0 0
    %340 = vmatpush2.bf16.msra.mxu0 0
    %341 = vmatprep.subr.bf16.mxu0 0
    %342 = vmatpush2.bf16.msra.mxu0 0
    %343 = vmatprep.mubr.bf16.mxu0 0
    %344 = vmatmul.mubr.bf16.gmra.mxu0 %v246
    %v345 = vpop.f32.mrf.mxu0
    %v346 = vadd.f32 0.0, %v345
    %v347 = vpop.f32.mrf.mxu0
    %v348 = vpop.f32.mrf.mxu0
    %v349 = vadd.f32 0.0, %v348
    %v350 = vpop.f32.mrf.mxu0
    %351 = vdwg.mxu0
    %v352 = vadd.f32 %v244, %v346
    %v353 = vadd.f32 %v245, %v349
    %354 = vst [vmem:[#allocation2] sm:$0xff] %v352
    %355 = vst [vmem:[#allocation2 + $0x8] sm:$0xff] %v353
    %v356 = vld [vmem:[#allocation2] sm:$0xff]
    %v357 = vld [vmem:[#allocation2 + $0x8] sm:$0xff]
    %358 = vst [vmem:[#allocation9] sm:$0xff] %v356
    %359 = vst [vmem:[#allocation9 + $0x8] sm:$0xff] %v357
    // Predicated region
    $region34: #{tpu_custom_call.1} parent=1 // pred_check
      _
    $region35: #{tpu_custom_call.1} parent=1 // pred_check_branch
      %361 = sbr.rel (0) target = $region37
    $region36: #{tpu_custom_call.1} parent=1 // pred_region
      %s363 = ssub.s32 256, 256
      %364 = vsyncadd [#allocation5], %s363
      %s365 = sshll.u32 [#allocation9], 4
      %s366 = int_to_ptr.vmem [resolvable:$true] %s365
      %371 = dma.vmem_to_hbm [thread:$0]  %s366, 256, %s5, [#allocation5], 128, 128, 8
    $region37: #{tpu_custom_call.1} parent=1 // pred_fallthru
      _
    // Predicated region
    $region38: #{tpu_custom_call.1} parent=1 // pred_check
      _
    $region39: #{tpu_custom_call.1} parent=1 // pred_check_branch
      %373 = sbr.rel (0) target = $region41
    $region40: #{tpu_custom_call.1} parent=1 // pred_region
      %374 = dma.done [#allocation5], 256
    $region41: #{tpu_custom_call.1} parent=1 // pred_fallthru
      _
    %375 = vsyncpa [#allocation4], 1
    %376 = vsyncpa [#allocation7], 1
    %377 = vsyncpa [#allocation5], 1

</llo_original>
